<compile_context>
chip_gen: v7x
topology: tpu7x:2x2x1
jax: 0.10.0
libtpu: 0.0.40
codegen_flags: <defaults>
</compile_context>

<pallas_src>
import functools
import math

import jax
import jax.numpy as jnp
import numpy as np
from jax.experimental import pallas as pl
from jax.experimental.pallas import tpu as pltpu

_HEADROOM_BYTES = 2 * 1024 * 1024   # Mosaic internal scratch / misc headroom
_SMALL_SLACK = 1 * 1024 * 1024      # w2 tile, fc2 temp, misc small buffers


def _cdiv(a, b):
    return -(-a // b)


def _vmem_budget_bytes():
    """Generation-aware scoped-VMEM budget (~75% of per-core physical VMEM)."""
    try:
        cap = int(pltpu.get_tpu_info().vmem_capacity_bytes)
    except Exception:
        cap = 64 * 1024 * 1024  # conservative (v7x-sized) default
    return max(32 * 1024 * 1024, min(int(0.75 * cap), cap - 8 * 1024 * 1024))


def _choose_batch_tile(B, bytes_per_row, fixed_bytes, budget, tb_max):
    """Largest batch tile whose working set fits the budget.

    Returns B itself (single full block, always layout-legal) when everything
    fits, otherwise a sublane/lane-friendly tile, or None if nothing fits.
    """
    avail = budget - fixed_bytes
    if avail <= 0 or bytes_per_row <= 0:
        return None
    fit = avail // bytes_per_row
    if fit >= B:
        return B
    if fit < 8:
        return None
    tb = min(tb_max, fit)
    if tb >= 128:
        tb = (tb // 128) * 128   # lane-dense output stores
    else:
        tb = (tb // 8) * 8       # sublane alignment for the x block
    return max(tb, 8)


def _choose_feature_tile(N, K, budget, tn_max):
    """Largest TN dividing N, multiple of 128, whose double-buffered [TN, K]
    weight tile uses at most ~1/3 of the budget."""
    if N % 128 != 0:
        return None
    for m in range(1, N // 128 + 1):
        if N % m != 0:
            continue
        tn = N // m
        if tn % 128 != 0:
            continue
        if tn_max is not None and tn > tn_max:
            continue
        if 2 * tn * K * 4 <= budget // 3:
            return tn
    return None


def _student_kernel_resident(x_ref, w1t_ref, w2_ref, o_ref, *, inv_sqrt_n, precision):
    # x_ref: [TB, N]   w1t_ref: [N, K]   w2_ref: [1, K]   o_ref: [1, 1, TB]
    h = jax.lax.dot_general(
        x_ref[...],
        w1t_ref[...],
        dimension_numbers=(((1,), (0,)), ((), ())),   # standard [TB,N] x [N,K]
        preferred_element_type=jnp.float32,
        precision=precision,
    )
    h = jnp.maximum(h, 0.0)                            # ReLU on the VPU
    out = jax.lax.dot_general(                         # fc2 -> lane-dense [1, TB]
        w2_ref[...],
        h,
        dimension_numbers=(((1,), (1,)), ((), ())),
        preferred_element_type=jnp.float32,
        precision=precision,
    )
    o_ref[...] = (out * inv_sqrt_n).reshape(o_ref.shape).astype(o_ref.dtype)


def _student_kernel_ntiled(x_ref, w1t_ref, w2_ref, o_ref, acc_ref, *, inv_sqrt_n, precision):
    # grid = (batch tiles, feature tiles); feature axis (contraction) is last.
    # x_ref: [TB, TN]   w1t_ref: [TN, K]   w2_ref: [1, K]
    # o_ref: [1, 1, TB] acc_ref: [TB, K] f32 scratch
    k = pl.program_id(1)

    @pl.when(k == 0)
    def _():
        acc_ref[...] = jnp.zeros_like(acc_ref)

    acc_ref[...] += jax.lax.dot_general(
        x_ref[...],
        w1t_ref[...],
        dimension_numbers=(((1,), (0,)), ((), ())),
        preferred_element_type=jnp.float32,
        precision=precision,
    )

    @pl.when(k == pl.num_programs(1) - 1)
    def _():
        h = jnp.maximum(acc_ref[...], 0.0)
        out = jax.lax.dot_general(
            w2_ref[...],
            h,
            dimension_numbers=(((1,), (1,)), ((), ())),
            preferred_element_type=jnp.float32,
            precision=precision,
        )
        o_ref[...] = (out * inv_sqrt_n).reshape(o_ref.shape).astype(o_ref.dtype)


def student_forward(x, w1, w2, *, tb_max=2048, tn_max=None,
                    force_feature_tiling=False, precision=None):
    """Pallas forward pass of Student.

    x  : [B, N] float32
    w1 : [K, N] float32  (fc1.weight, PyTorch layout)
    w2 : [1, K] float32  (fc2.weight)
    returns [B, 1] float32
    """
    B, N = x.shape
    K, N2 = w1.shape
    assert N == N2 and w2.shape == (1, K)

    # One-time relayout outside the kernel so the MXU sees RHS as [contract, out].
    w1t = jnp.transpose(w1)  # [N, K]

    budget = _vmem_budget_bytes()
    usable = budget - _HEADROOM_BYTES
    inv_sqrt_n = 1.0 / math.sqrt(N)

    cost = pl.CostEstimate(
        flops=2 * B * N * K + 2 * B * K,
        transcendentals=0,
        bytes_accessed=4 * (B * N + N * K + K + B),
    )

    tb = None
    resident_w1_bytes = 2 * K * N * 4  # double-buffered resident w1
    if not force_feature_tiling and resident_w1_bytes <= usable // 3:
        tb = _choose_batch_tile(
            B,
            bytes_per_row=2 * N * 4 + K * 4 + 16,  # x dbl-buf + h row + out
            fixed_bytes=resident_w1_bytes + _SMALL_SLACK,
            budget=usable,
            tb_max=tb_max,
        )

    if tb is not None:
        # ------------------------- resident-weights path -------------------------
        num_bt = _cdiv(B, tb)
        kernel = functools.partial(
            _student_kernel_resident, inv_sqrt_n=inv_sqrt_n, precision=precision
        )
        out = pl.pallas_call(
            kernel,
            out_shape=jax.ShapeDtypeStruct((num_bt, 1, tb), jnp.float32),
            grid_spec=pltpu.PrefetchScalarGridSpec(
                num_scalar_prefetch=0,
                grid=(num_bt,),
                in_specs=[
                    pl.BlockSpec((tb, N), lambda i: (i, 0)),   # x: batch-tiled
                    pl.BlockSpec((N, K), lambda i: (0, 0)),    # w1t: resident
                    pl.BlockSpec((1, K), lambda i: (0, 0)),    # w2: resident
                ],
                out_specs=pl.BlockSpec((1, 1, tb), lambda i: (i, 0, 0)),
            ),
            compiler_params=pltpu.CompilerParams(
                dimension_semantics=("parallel",),
                vmem_limit_bytes=budget,
            ),
            cost_estimate=cost,
        )(x, w1t, w2)
    else:
        # --------------------- feature(N)-tiled accumulator path -----------------
        tn = _choose_feature_tile(N, K, usable, tn_max)
        if tn is None:
            raise ValueError(
                "Student Pallas kernel: weights too large for resident VMEM and no "
                "valid 128-multiple feature tile divides N=%d (K=%d)." % (N, K)
            )
        tb = _choose_batch_tile(
            B,
            bytes_per_row=2 * tn * 4 + K * 4 + 16,
            fixed_bytes=2 * tn * K * 4 + _SMALL_SLACK,
            budget=usable,
            tb_max=tb_max,
        )
        if tb is None:
            raise ValueError(
                "Student Pallas kernel: no batch tile fits VMEM for N=%d K=%d TN=%d."
                % (N, K, tn)
            )
        num_bt = _cdiv(B, tb)
        num_nt = N // tn
        kernel = functools.partial(
            _student_kernel_ntiled, inv_sqrt_n=inv_sqrt_n, precision=precision
        )
        out = pl.pallas_call(
            kernel,
            out_shape=jax.ShapeDtypeStruct((num_bt, 1, tb), jnp.float32),
            grid_spec=pltpu.PrefetchScalarGridSpec(
                num_scalar_prefetch=0,
                grid=(num_bt, num_nt),                      # reduction axis last
                in_specs=[
                    pl.BlockSpec((tb, tn), lambda i, k: (i, k)),
                    pl.BlockSpec((tn, K), lambda i, k: (k, 0)),
                    pl.BlockSpec((1, K), lambda i, k: (0, 0)),
                ],
                out_specs=pl.BlockSpec((1, 1, tb), lambda i, k: (i, 0, 0)),
                scratch_shapes=[pltpu.VMEM((tb, K), jnp.float32)],
            ),
            compiler_params=pltpu.CompilerParams(
                dimension_semantics=("parallel", "arbitrary"),
                vmem_limit_bytes=budget,
            ),
            cost_estimate=cost,
        )(x, w1t, w2)

    # Lane-dense [num_bt, 1, TB] tiles -> [B, 1] (drops the padded tail rows).
    return out.reshape(num_bt * tb)[:B].reshape(B, 1)


def _reference_forward_np(x, w1, w2):
    n = x.shape[1]
    h = np.maximum(x @ w1.T / math.sqrt(n), 0.0)
    return h @ w2.T


if __name__ == "__main__":
    # Small shapes consistent with the module: N input features, K hidden, B samples.
    B, N, K = 8, 32, 16

    key = jax.random.PRNGKey(0)
    kx, kw1, kw2 = jax.random.split(key, 3)

    x = jax.random.normal(kx, (B, N), dtype=jnp.float32)
    w1 = jax.random.normal(kw1, (K, N), dtype=jnp.float32)   # fc1.weight
    w2 = jax.random.normal(kw2, (1, K), dtype=jnp.float32)   # fc2.weight

    # Perf path (default MXU precision) + high-precision path for a tight check.
    out = jax.block_until_ready(student_forward(x, w1, w2))
    out_hi = jax.block_until_ready(
        student_forward(x, w1, w2, precision=jax.lax.Precision.HIGHEST)
    )
    ref = _reference_forward_np(np.asarray(x), np.asarray(w1), np.asarray(w2))
    assert out.shape == (B, 1)
    assert np.allclose(np.asarray(out_hi), ref, atol=1e-4, rtol=1e-4), float(
        np.max(np.abs(np.asarray(out_hi) - ref))
    )
    # Default f32 matmul precision on the MXU may use bf16 passes -> looser check.
    assert np.allclose(np.asarray(out), ref, atol=5e-2, rtol=5e-2), float(
        np.max(np.abs(np.asarray(out) - ref))
    )

    # Batch-tail path (B not a sublane multiple) without any host-side padding.
    B2 = 10
    x2 = jax.random.normal(jax.random.PRNGKey(1), (B2, N), dtype=jnp.float32)
    out2 = jax.block_until_ready(
        student_forward(x2, w1, w2, precision=jax.lax.Precision.HIGHEST)
    )
    ref2 = _reference_forward_np(np.asarray(x2), np.asarray(w1), np.asarray(w2))
    assert out2.shape == (B2, 1)
    assert np.allclose(np.asarray(out2), ref2, atol=1e-4, rtol=1e-4)

    # Forced feature-tiled (accumulator) fallback path: N=256 split into 2x128 tiles.
    B3, N3, K3 = 24, 256, 32
    k3 = jax.random.PRNGKey(2)
    kx3, kw13, kw23 = jax.random.split(k3, 3)
    x3 = jax.random.normal(kx3, (B3, N3), dtype=jnp.float32)
    w13 = jax.random.normal(kw13, (K3, N3), dtype=jnp.float32)
    w23 = jax.random.normal(kw23, (1, K3), dtype=jnp.float32)
    out3 = jax.block_until_ready(
        student_forward(x3, w13, w23, precision=jax.lax.Precision.HIGHEST,
                        force_feature_tiling=True, tn_max=128)
    )
    ref3 = _reference_forward_np(np.asarray(x3), np.asarray(w13), np.asarray(w23))
    assert out3.shape == (B3, 1)
    assert np.allclose(np.asarray(out3), ref3, atol=1e-4, rtol=1e-4), float(
        np.max(np.abs(np.asarray(out3) - ref3))
    )

    print("KERNEL_OK")
</pallas_src>

<mosaic_0001>
module attributes {stable_mosaic.version = 11 : i64} {
  func.func @_student_kernel_resident(%arg0: i32, %arg1: memref<8x32xf32, #tpu.memory_space<vmem>>, %arg2: memref<32x16xf32, #tpu.memory_space<vmem>>, %arg3: memref<1x16xf32, #tpu.memory_space<vmem>>, %arg4: memref<1x1x8xf32, #tpu.memory_space<vmem>>) attributes {dimension_semantics = [#tpu.dimension_semantics<parallel>], iteration_bounds = array<i64: 1>, scalar_prefetch = 0 : i64, scratch_operands = 0 : i64, tpu.core_type = #tpu.core_type<tc>, window_params = [{transform_indices = @transform_0, window_bounds = array<i64: 8, 32>}, {pipeline_mode = #tpu.pipeline_mode<synchronous>, transform_indices = @transform_1, window_bounds = array<i64: 32, 16>}, {pipeline_mode = #tpu.pipeline_mode<synchronous>, transform_indices = @transform_2, window_bounds = array<i64: 1, 16>}, {transform_indices = @transform_3, window_bounds = array<i64: 1, 1, 8>}]} {
    %c0 = arith.constant 0 : index
    %c0_0 = arith.constant 0 : index
    %0 = vector.load %arg1[%c0, %c0_0] : memref<8x32xf32, #tpu.memory_space<vmem>>, vector<8x32xf32>
    %c0_1 = arith.constant 0 : index
    %c0_2 = arith.constant 0 : index
    %1 = vector.load %arg2[%c0_1, %c0_2] : memref<32x16xf32, #tpu.memory_space<vmem>>, vector<32x16xf32>
    %cst = arith.constant dense<0.000000e+00> : vector<8x16xf32>
    %2 = tpu.matmul %0, %1, %cst {dimension_numbers = #tpu.dot_dimension_numbers<[1], [0], [0], [1], [0, 0, 1, 1], [], []>} : vector<8x32xf32>, vector<32x16xf32>, vector<8x16xf32> -> vector<8x16xf32>
    %cst_3 = arith.constant 0.000000e+00 : f32
    %3 = vector.broadcast %cst_3 : f32 to vector<8x16xf32>
    %4 = arith.maximumf %2, %3 : vector<8x16xf32>
    %c0_4 = arith.constant 0 : index
    %c0_5 = arith.constant 0 : index
    %5 = vector.load %arg3[%c0_4, %c0_5] : memref<1x16xf32, #tpu.memory_space<vmem>>, vector<1x16xf32>
    %cst_6 = arith.constant dense<0.000000e+00> : vector<1x8xf32>
    %6 = tpu.matmul %5, %4, %cst_6 {dimension_numbers = #tpu.dot_dimension_numbers<[1], [1], [0], [0], [0, 0, 1, 0], [], []>} : vector<1x16xf32>, vector<8x16xf32>, vector<1x8xf32> -> vector<1x8xf32>
    %cst_7 = arith.constant 0.176776692 : f32
    %7 = vector.broadcast %cst_7 : f32 to vector<1x8xf32>
    %8 = arith.mulf %6, %7 : vector<1x8xf32>
    %9 = vector.shape_cast %8 : vector<1x8xf32> to vector<1x1x8xf32>
    %c0_8 = arith.constant 0 : index
    %c0_9 = arith.constant 0 : index
    %c0_10 = arith.constant 0 : index
    %10 = vector.load %arg4[%c0_8, %c0_9, %c0_10] : memref<1x1x8xf32, #tpu.memory_space<vmem>>, vector<1x1x8xf32>
    tpu.vector_store %arg4[%c0_8, %c0_9, %c0_10], %9 {strides = array<i32>} : memref<1x1x8xf32, #tpu.memory_space<vmem>>, vector<1x1x8xf32>,
    return
  }
  func.func @transform_0(%arg0: i32) -> (i32, i32) {
    %c0_i32 = arith.constant 0 : i32
    %c0_i32_0 = arith.constant 0 : i32
    return %arg0, %c0_i32 : i32, i32
  }
  func.func @transform_1(%arg0: i32) -> (i32, i32) {
    %c0_i32 = arith.constant 0 : i32
    %c0_i32_0 = arith.constant 0 : i32
    %c0_i32_1 = arith.constant 0 : i32
    return %c0_i32, %c0_i32_0 : i32, i32
  }
  func.func @transform_2(%arg0: i32) -> (i32, i32) {
    %c0_i32 = arith.constant 0 : i32
    %c0_i32_0 = arith.constant 0 : i32
    %c0_i32_1 = arith.constant 0 : i32
    return %c0_i32, %c0_i32_0 : i32, i32
  }
  func.func @transform_3(%arg0: i32) -> (i32, i32, i32) {
    %c0_i32 = arith.constant 0 : i32
    %c0_i32_0 = arith.constant 0 : i32
    %c0_i32_1 = arith.constant 0 : i32
    return %arg0, %c0_i32, %c0_i32_0 : i32, i32, i32
  }
}

</mosaic_0001>

<llo_original>
// kernel: tpu_custom_call.1
$region0: #{tpu_custom_call.1}
  #allocation0 [shape = 'u32[]', space=smem, size = 0x4, offset = 0x4, fixed_abs, tag = 'smem constant byte address 0x4 - core index']
  #allocation1 [shape = 'u32[144,128]{1,0:T(1,128)}', space=vmem, size = 0x12000, scoped, tag = 'internal scratch']
  %s0 = inlined_call_operand.vmem [shape: f32[8,32], index: 0, kind: input, shape index: {}]
  %s1 = inlined_call_operand.vmem [shape: f32[32,16], index: 1, kind: input, shape index: {}]
  %s2 = inlined_call_operand.vmem [shape: f32[1,16], index: 2, kind: input, shape index: {}]
  %s3 = inlined_call_operand.hbm [shape: f32[1,1,8], index: 3, kind: output, shape index: {}]
  %s4 = sld [smem:[#allocation0]]
  $region22: #{tpu_custom_call.1} parent=0
    _
  %s6 = ssub.s32 1, %s4
  %s7 = scalar_select 0, %s6, %s4
  $region1: #{tpu_custom_call.1} parent=0
    #allocation2 [shape = 'u8[512]{0}', space=vmem, size = 0x400, scoped, tag = 'output window, operand 0, single buffered']
    #allocation3 [shape = 's32[1]{0}', space=sflag, size = 0x4, scoped, tag = 'scoped memory for tpu_custom_call.1']
    %8 = vsyncpa [#allocation3], 0
    // Predicated region
    $region2: #{tpu_custom_call.1} parent=1 // pred_check
      _
    $region3: #{tpu_custom_call.1} parent=1 // pred_check_branch
      %10 = sbr.rel (0) target = $region5
    $region4: #{tpu_custom_call.1} parent=1 // pred_region
      _
    $region5: #{tpu_custom_call.1} parent=1 // pred_fallthru
      _
    // Predicated region
    $region6: #{tpu_custom_call.1} parent=1 // pred_check
      _
    $region7: #{tpu_custom_call.1} parent=1 // pred_check_branch
      %12 = sbr.rel (0) target = $region9
    $region8: #{tpu_custom_call.1} parent=1 // pred_region
      _
    $region9: #{tpu_custom_call.1} parent=1 // pred_fallthru
      _
    // Predicated region
    $region10: #{tpu_custom_call.1} parent=1 // pred_check
      _
    $region11: #{tpu_custom_call.1} parent=1 // pred_check_branch
      %14 = sbr.rel (0) target = $region13
    $region12: #{tpu_custom_call.1} parent=1 // pred_region
      _
    $region13: #{tpu_custom_call.1} parent=1 // pred_fallthru
      _
    %v15 = vld [vmem:[%s0] sm:$0xff]
    %v16 = vld [vmem:[%s1] sm:$0xff]
    %v17 = vld [vmem:[%s1 + $0x8] sm:$0xff]
    %v18 = vld [vmem:[%s1 + $0x10] sm:$0xff]
    %v19 = vld [vmem:[%s1 + $0x18] sm:$0xff]
    %vm20 = vcmask 261120
    %v22 = vsel %vm20, %v15, 0
    %24 = vmatprep.subr.mxu0 0.0
    %25 = vmatpush1.msra.mxu0 %v16
    %26 = vmatprep.subr.mxu0 0.0
    %27 = vmatpush1.msra.mxu0 %v17
    %28 = vmatprep.subr.mxu0 0.0
    %29 = vmatpush1.msra.mxu0 %v18
    %30 = vmatprep.subr.mxu0 0.0
    %31 = vmatpush1.msra.mxu0 %v19
    %32 = vmatprep.subr.mxu0 0.0
    %33 = vmatpush1.msra.mxu0 0.0
    %34 = vmatprep.subr.mxu0 0.0
    %35 = vmatpush1.msra.mxu0 0.0
    %36 = vmatprep.subr.mxu0 0.0
    %37 = vmatpush1.msra.mxu0 0.0
    %38 = vmatprep.subr.mxu0 0.0
    %39 = vmatpush1.msra.mxu0 0.0
    %40 = vmatprep.subr.mxu0 0.0
    %41 = vmatpush1.msra.mxu0 0.0
    %42 = vmatprep.subr.mxu0 0.0
    %43 = vmatpush1.msra.mxu0 0.0
    %44 = vmatprep.subr.mxu0 0.0
    %45 = vmatpush1.msra.mxu0 0.0
    %46 = vmatprep.subr.mxu0 0.0
    %47 = vmatpush1.msra.mxu0 0.0
    %48 = vmatprep.subr.mxu0 0.0
    %49 = vmatpush1.msra.mxu0 0.0
    %50 = vmatprep.subr.mxu0 0.0
    %51 = vmatpush1.msra.mxu0 0.0
    %52 = vmatprep.subr.mxu0 0.0
    %53 = vmatpush1.msra.mxu0 0.0
    %54 = vmatprep.subr.mxu0 0.0
    %55 = vmatpush1.msra.mxu0 0.0
    %56 = vmatprep.subr.mxu0 0.0
    %57 = vmatpush1.msra.mxu0 0.0
    %58 = vmatprep.subr.mxu0 0.0
    %59 = vmatpush1.msra.mxu0 0.0
    %60 = vmatprep.subr.mxu0 0.0
    %61 = vmatpush1.msra.mxu0 0.0
    %62 = vmatprep.subr.mxu0 0.0
    %63 = vmatpush1.msra.mxu0 0.0
    %64 = vmatprep.subr.mxu0 0.0
    %65 = vmatpush1.msra.mxu0 0.0
    %66 = vmatprep.subr.mxu0 0.0
    %67 = vmatpush1.msra.mxu0 0.0
    %68 = vmatprep.subr.mxu0 0.0
    %69 = vmatpush1.msra.mxu0 0.0
    %70 = vmatprep.subr.mxu0 0.0
    %71 = vmatpush1.msra.mxu0 0.0
    %72 = vmatprep.subr.mxu0 0.0
    %73 = vmatpush1.msra.mxu0 0.0
    %74 = vmatprep.subr.mxu0 0.0
    %75 = vmatpush1.msra.mxu0 0.0
    %76 = vmatprep.subr.mxu0 0.0
    %77 = vmatpush1.msra.mxu0 0.0
    %78 = vmatprep.subr.mxu0 0.0
    %79 = vmatpush1.msra.mxu0 0.0
    %80 = vmatprep.subr.mxu0 0.0
    %81 = vmatpush1.msra.mxu0 0.0
    %82 = vmatprep.subr.mxu0 0.0
    %83 = vmatpush1.msra.mxu0 0.0
    %84 = vmatprep.subr.mxu0 0.0
    %85 = vmatpush1.msra.mxu0 0.0
    %86 = vmatprep.subr.mxu0 0.0
    %87 = vmatpush1.msra.mxu0 0.0
    %88 = vmatprep.mubr.f32.mxu0 0.0
    %89 = vmatmul.mubr.f32.gmra.mrb[0].mxu0 %v22
    %v90 = vpop.f32.mrb[0].mxu0
    %v91 = vadd.f32 0.0, %v90
    %v92 = vpop.f32.mrb[0].mxu0
    %93 = vdwg.mxu0
    %v94 = vmax.f32 %v91, 0.0
    %v95 = vld [vmem:[%s2] sm:$0x1]
    %vm96 = vcmask 130048
    %v98 = vsel %vm96, %v95, 0
    %v101 = vsel %vm96, %v94, 0
    %103 = vmatprep.subr.mxu0 0.0
    %104 = vmatpush1.xpose.msra.mxu0 %v101
    %105 = vmatprep.subr.mxu0 0.0
    %106 = vmatpush1.xpose.msra.mxu0 0.0
    %107 = vmatprep.subr.mxu0 0.0
    %108 = vmatpush1.xpose.msra.mxu0 0.0
    %109 = vmatprep.subr.mxu0 0.0
    %110 = vmatpush1.xpose.msra.mxu0 0.0
    %111 = vmatprep.subr.mxu0 0.0
    %112 = vmatpush1.xpose.msra.mxu0 0.0
    %113 = vmatprep.subr.mxu0 0.0
    %114 = vmatpush1.xpose.msra.mxu0 0.0
    %115 = vmatprep.subr.mxu0 0.0
    %116 = vmatpush1.xpose.msra.mxu0 0.0
    %117 = vmatprep.subr.mxu0 0.0
    %118 = vmatpush1.xpose.msra.mxu0 0.0
    %119 = vmatprep.subr.mxu0 0.0
    %120 = vmatpush1.xpose.msra.mxu0 0.0
    %121 = vmatprep.subr.mxu0 0.0
    %122 = vmatpush1.xpose.msra.mxu0 0.0
    %123 = vmatprep.subr.mxu0 0.0
    %124 = vmatpush1.xpose.msra.mxu0 0.0
    %125 = vmatprep.subr.mxu0 0.0
    %126 = vmatpush1.xpose.msra.mxu0 0.0
    %127 = vmatprep.subr.mxu0 0.0
    %128 = vmatpush1.xpose.msra.mxu0 0.0
    %129 = vmatprep.subr.mxu0 0.0
    %130 = vmatpush1.xpose.msra.mxu0 0.0
    %131 = vmatprep.subr.mxu0 0.0
    %132 = vmatpush1.xpose.msra.mxu0 0.0
    %133 = vmatprep.subr.mxu0 0.0
    %134 = vmatpush1.xpose.msra.mxu0 0.0
    %135 = vmatprep.subr.mxu0 0.0
    %136 = vmatpush1.xpose.msra.mxu0 0.0
    %137 = vmatprep.subr.mxu0 0.0
    %138 = vmatpush1.xpose.msra.mxu0 0.0
    %139 = vmatprep.subr.mxu0 0.0
    %140 = vmatpush1.xpose.msra.mxu0 0.0
    %141 = vmatprep.subr.mxu0 0.0
    %142 = vmatpush1.xpose.msra.mxu0 0.0
    %143 = vmatprep.subr.mxu0 0.0
    %144 = vmatpush1.xpose.msra.mxu0 0.0
    %145 = vmatprep.subr.mxu0 0.0
    %146 = vmatpush1.xpose.msra.mxu0 0.0
    %147 = vmatprep.subr.mxu0 0.0
    %148 = vmatpush1.xpose.msra.mxu0 0.0
    %149 = vmatprep.subr.mxu0 0.0
    %150 = vmatpush1.xpose.msra.mxu0 0.0
    %151 = vmatprep.subr.mxu0 0.0
    %152 = vmatpush1.xpose.msra.mxu0 0.0
    %153 = vmatprep.subr.mxu0 0.0
    %154 = vmatpush1.xpose.msra.mxu0 0.0
    %155 = vmatprep.subr.mxu0 0.0
    %156 = vmatpush1.xpose.msra.mxu0 0.0
    %157 = vmatprep.subr.mxu0 0.0
    %158 = vmatpush1.xpose.msra.mxu0 0.0
    %159 = vmatprep.subr.mxu0 0.0
    %160 = vmatpush1.xpose.msra.mxu0 0.0
    %161 = vmatprep.subr.mxu0 0.0
    %162 = vmatpush1.xpose.msra.mxu0 0.0
    %163 = vmatprep.subr.mxu0 0.0
    %164 = vmatpush1.xpose.msra.mxu0 0.0
    %165 = vmatprep.subr.mxu0 0.0
    %166 = vmatpush1.xpose.msra.mxu0 0.0
    %167 = vmatprep.mubr.f32.mxu0 0.0
    %168 = vmatmul.mubr.f32.gmra.mrb[0].mxu0 %v98
    %v169 = vpop.f32.mrb[0].mxu0
    %v170 = vadd.f32 0.0, %v169
    %v171 = vpop.f32.mrb[0].mxu0
    %172 = vdwg.mxu0
    %v173 = vmul.f32 %v170, 0.17677669
    %vm174 = vcmask 57344
    %175 = vst.msk [vmem:[#allocation2] sm:$0x1] %vm174, %v173
    // Predicated region
    $region14: #{tpu_custom_call.1} parent=1 // pred_check
      _
    $region15: #{tpu_custom_call.1} parent=1 // pred_check_branch
      %177 = sbr.rel (0) target = $region17
    $region16: #{tpu_custom_call.1} parent=1 // pred_region
      %s179 = ssub.s32 16, 16
      %180 = vsyncadd [#allocation3], %s179
      %s182 = sshll.u32 [#allocation2], 4
      %s183 = int_to_ptr.vmem [resolvable:$true] %s182
      %185 = dma.vmem_to_hbm [thread:$0]  %s183, 16, %s3, [#allocation3]
    $region17: #{tpu_custom_call.1} parent=1 // pred_fallthru
      _
    // Predicated region
    $region18: #{tpu_custom_call.1} parent=1 // pred_check
      _
    $region19: #{tpu_custom_call.1} parent=1 // pred_check_branch
      %187 = sbr.rel (0) target = $region21
    $region20: #{tpu_custom_call.1} parent=1 // pred_region
      %188 = dma.done [#allocation3], 16
    $region21: #{tpu_custom_call.1} parent=1 // pred_fallthru
      _
    %189 = vsyncpa [#allocation3], 1

</llo_original>
